<compile_context>
chip_gen: v6e
topology: v6e:2x2x1
jax: 0.10.0
libtpu: 0.0.40
codegen_flags: <defaults>
</compile_context>

<pallas_src>
import jax
import jax.numpy as jnp
from jax.experimental import pallas as pl
from jax.experimental.pallas import tpu as pltpu


def _round_down(x: int, m: int) -> int:
    return (x // m) * m


def _round_up(x: int, m: int) -> int:
    return -(-x // m) * m


def _vmem_params() -> tuple:
    """(tile VMEM budget, vmem_limit_bytes), generation aware.

    v7x: 64 MiB VMEM per TensorCore (32 MiB scoped default) -> 24 MiB budget
    for the double-buffered in+out tiles, 30 MiB limit.
    v5e/v6e: 128 MiB physical -> 48 MiB budget, raise the scoped limit to 64 MiB.
    """
    try:
        vmem_bytes = int(pltpu.get_tpu_info().vmem_capacity_bytes)
    except Exception:
        vmem_bytes = 64 * 1024 * 1024  # conservative (v7x-sized) fallback
    if vmem_bytes <= 64 * 1024 * 1024:
        return 24 * 1024 * 1024, 30 * 1024 * 1024
    return 48 * 1024 * 1024, 64 * 1024 * 1024


def _pick_tile_b(b: int, c: int, target_channel: int, itemsize: int,
                 vmem_budget_bytes: int) -> int:
    """Rows per grid step.

    Sized from the VMEM budget (double-buffered input + output tiles) so each
    step moves as much HBM traffic as possible, then capped so the grid has at
    least 2 steps (even count preferred) for v7x dual-TensorCore sharding and
    pipeline overlap on single-core chips.
    """
    # dtype-aware sublane granule: f32 -> 8 rows, bf16 -> 16, int8/fp8 -> 32.
    sublane = max(8, 32 // max(1, itemsize))
    if b <= sublane:
        return b  # full-extent block: divisibility rule is waived.

    per_row_bytes = 2 * (c + target_channel) * itemsize  # 2x = double buffer
    tile_b = max(sublane,
                 _round_down(vmem_budget_bytes // per_row_bytes, sublane))

    # Ensure at least two grid steps.
    tile_b = min(tile_b, max(sublane, _round_down(pl.cdiv(b, 2), sublane)))

    # Prefer an even step count so the two v7x TensorCores split evenly.
    steps = pl.cdiv(b, tile_b)
    if steps > 1 and steps % 2 == 1:
        cand = max(sublane, _round_up(pl.cdiv(b, steps + 1), sublane))
        if cand <= tile_b and pl.cdiv(b, cand) % 2 == 0:
            tile_b = cand
    return tile_b


def _make_pad_kernel(in_channels: int, target_channel: int):
    """Kernel closure: data region + pad region, stores kept lane-dense."""
    pad_c = target_channel - in_channels
    lane_aligned = (in_channels % 128 == 0) and (target_channel % 128 == 0)

    if lane_aligned:
        # Both regions start on 128-lane boundaries: two non-overlapping,
        # unmasked slice stores.  No jnp.concatenate -> no full-tile vreg
        # materialization / spills at large tile_b.
        def kernel(x_ref, o_ref):
            o_ref[:, :in_channels] = x_ref[...]
            o_ref[:, in_channels:] = jnp.zeros(
                (o_ref.shape[0], pad_c), dtype=o_ref.dtype
            )
    else:
        # Unaligned widths: zero the whole tile first (lane-dense unmasked
        # store), then overwrite the first C lanes (single masked store).
        # The VMEM rewrite of the data lanes is free relative to HBM writeback.
        # TODO(synk): if bundle dumps ever show vst-slot saturation at large
        # tiles, move the data copy to pltpu.sync_copy(x_ref, o_ref.at[:, :C]).
        def kernel(x_ref, o_ref):
            o_ref[...] = jnp.zeros(o_ref.shape, dtype=o_ref.dtype)
            o_ref[:, :in_channels] = x_ref[...]

    return kernel


def _channel_zero_padding_pallas(x: jax.Array, target_channel: int) -> jax.Array:
    b, c = x.shape
    itemsize = x.dtype.itemsize
    vmem_budget, vmem_limit = _vmem_params()
    tile_b = _pick_tile_b(b, c, target_channel, itemsize, vmem_budget)
    grid = (pl.cdiv(b, tile_b),)

    return pl.pallas_call(
        _make_pad_kernel(c, target_channel),
        out_shape=jax.ShapeDtypeStruct((b, target_channel), x.dtype),
        grid=grid,
        in_specs=[pl.BlockSpec((tile_b, c), lambda i: (i, 0))],
        out_specs=pl.BlockSpec((tile_b, target_channel), lambda i: (i, 0)),
        compiler_params=pltpu.CompilerParams(
            dimension_semantics=("parallel",),  # row tiles are independent
            vmem_limit_bytes=vmem_limit,
        ),
        cost_estimate=pl.CostEstimate(
            flops=0,
            transcendentals=0,
            bytes_accessed=b * (c + target_channel) * itemsize,
        ),
    )(x)


def channel_zero_padding(
    x: jax.Array,
    target_channel: int,
    *,
    min_pallas_elements: int = 1 << 20,
    force_pallas: bool = False,
) -> jax.Array:
    """ChannelZeroPadding.forward: concat([x, zeros], axis=1)."""
    b, c = x.shape
    padding_channels = target_channel - c
    assert padding_channels > 0, "Input channels larger than specified"

    # Small / fusable tensors: XLA fuses jnp.pad into the consumer and avoids
    # materializing the padded array at all -- no standalone kernel can beat
    # that, so only launch Pallas for genuinely large outputs.
    if not force_pallas and b * target_channel < min_pallas_elements:
        return jnp.pad(x, ((0, 0), (0, padding_channels)))

    return _channel_zero_padding_pallas(x, target_channel)


if __name__ == "__main__":
    key = jax.random.PRNGKey(0)
    k_small, k_med, k_bf = jax.random.split(key, 3)

    # --- Small shape consistent with the module's (B, C) forward. ----------
    B, C, TARGET = 2, 4, 16
    x_small = jax.random.normal(k_small, (B, C), dtype=jnp.float32)
    ref_small = jnp.concatenate(
        [x_small, jnp.zeros((B, TARGET - C), dtype=x_small.dtype)], axis=1
    )
    out_small = jax.block_until_ready(
        channel_zero_padding(x_small, TARGET, force_pallas=True)
    )
    assert out_small.shape == (B, TARGET)
    assert out_small.dtype == x_small.dtype
    assert jnp.array_equal(out_small, ref_small), "Pallas small-shape mismatch"

    # Default dispatcher routes tiny tensors to the fused XLA pad path.
    out_xla = jax.block_until_ready(channel_zero_padding(x_small, TARGET))
    assert jnp.array_equal(out_xla, ref_small), "XLA tiny-path mismatch"

    # --- Lane-aligned f32 case: multi-step even grid, two unmasked stores. --
    B2, C2, T2 = 4096, 128, 384
    x_med = jax.random.normal(k_med, (B2, C2), dtype=jnp.float32)
    out_med = jax.block_until_ready(channel_zero_padding(x_med, T2))
    ref_med = jnp.concatenate(
        [x_med, jnp.zeros((B2, T2 - C2), dtype=x_med.dtype)], axis=1
    )
    assert out_med.shape == (B2, T2)
    assert jnp.array_equal(out_med, ref_med), "Pallas aligned-path mismatch"

    # --- Unaligned bf16 case: zero-then-overwrite path, 16-row sublanes. ----
    B3, C3, T3 = 8192, 96, 200
    x_bf = jax.random.normal(k_bf, (B3, C3), dtype=jnp.bfloat16)
    out_bf = jax.block_until_ready(channel_zero_padding(x_bf, T3))
    ref_bf = jnp.concatenate(
        [x_bf, jnp.zeros((B3, T3 - C3), dtype=x_bf.dtype)], axis=1
    )
    assert out_bf.shape == (B3, T3)
    assert out_bf.dtype == x_bf.dtype
    assert jnp.array_equal(out_bf, ref_bf), "Pallas unaligned-path mismatch"

    print("KERNEL_OK")
</pallas_src>

<mosaic_0001>
module attributes {stable_mosaic.version = 11 : i64} {
  func.func @kernel(%arg0: i32, %arg1: memref<2x4xf32, #tpu.memory_space<vmem>>, %arg2: memref<2x16xf32, #tpu.memory_space<vmem>>) attributes {dimension_semantics = [#tpu.dimension_semantics<parallel>], iteration_bounds = array<i64: 1>, scalar_prefetch = 0 : i64, scratch_operands = 0 : i64, tpu.core_type = #tpu.core_type<tc>, window_params = [{transform_indices = @transform_0, window_bounds = array<i64: 2, 4>}, {transform_indices = @transform_1, window_bounds = array<i64: 2, 16>}]} {
    %cst = arith.constant 0.000000e+00 : f32
    %0 = vector.broadcast %cst : f32 to vector<2x16xf32>
    %c0 = arith.constant 0 : index
    %c0_0 = arith.constant 0 : index
    %1 = vector.load %arg2[%c0, %c0_0] : memref<2x16xf32, #tpu.memory_space<vmem>>, vector<2x16xf32>
    tpu.vector_store %arg2[%c0, %c0_0], %0 {strides = array<i32>} : memref<2x16xf32, #tpu.memory_space<vmem>>, vector<2x16xf32>,
    %c0_1 = arith.constant 0 : index
    %c0_2 = arith.constant 0 : index
    %2 = vector.load %arg1[%c0_1, %c0_2] : memref<2x4xf32, #tpu.memory_space<vmem>>, vector<2x4xf32>
    %c0_3 = arith.constant 0 : index
    %c0_4 = arith.constant 0 : index
    %3 = vector.load %arg2[%c0_3, %c0_4] : memref<2x16xf32, #tpu.memory_space<vmem>>, vector<2x4xf32>
    tpu.vector_store %arg2[%c0_3, %c0_4], %2 {strides = array<i32>} : memref<2x16xf32, #tpu.memory_space<vmem>>, vector<2x4xf32>,
    return
  }
  func.func @transform_0(%arg0: i32) -> (i32, i32) {
    %c0_i32 = arith.constant 0 : i32
    %c0_i32_0 = arith.constant 0 : i32
    return %arg0, %c0_i32 : i32, i32
  }
  func.func @transform_1(%arg0: i32) -> (i32, i32) {
    %c0_i32 = arith.constant 0 : i32
    %c0_i32_0 = arith.constant 0 : i32
    return %arg0, %c0_i32 : i32, i32
  }
}

</mosaic_0001>

<llo_original>
// kernel: tpu_custom_call.1
$region0: #{tpu_custom_call.1}
  #allocation0 [shape = 'u32[]', space=smem, size = 0x4, offset = 0x4, fixed_abs, tag = 'smem constant byte address 0x4 - core index']
  #allocation1 [shape = 'u32[144,128]{1,0:T(1,128)}', space=vmem, size = 0x12000, scoped, tag = 'internal scratch']
  %s0 = inlined_call_operand.hbm [shape: f32[2,4], index: 0, kind: input, shape index: {}]
  %s1 = inlined_call_operand.hbm [shape: f32[2,16], index: 1, kind: output, shape index: {}]
  %s2 = sld [smem:[#allocation0]]
  $region18: #{tpu_custom_call.1} parent=0
    _
  %s4 = ssub.s32 1, %s2
  %s5 = scalar_select 0, %s4, %s2
  $region1: #{tpu_custom_call.1} parent=0
    #allocation2 [shape = 'u8[1024]{0}', space=vmem, size = 0x400, scoped, tag = 'input window, operand 0, single buffered']
    #allocation3 [shape = 's32[1]{0}', space=sflag, size = 0x4, scoped, tag = 'scoped memory for tpu_custom_call.1']
    #allocation4 [shape = 's32[1]{0}', space=sflag, size = 0x4, scoped, tag = 'scoped memory for tpu_custom_call.1']
    #allocation5 [shape = 'u8[1024]{0}', space=vmem, size = 0x400, scoped, tag = 'output window, operand 0, single buffered']
    %6 = vsyncpa [#allocation3], 0
    %7 = vsyncpa [#allocation4], 0
    // Predicated region
    $region2: #{tpu_custom_call.1} parent=1 // pred_check
      _
    $region3: #{tpu_custom_call.1} parent=1 // pred_check_branch
      %9 = sbr.rel (0) target = $region5
    $region4: #{tpu_custom_call.1} parent=1 // pred_region
      %s11 = ssub.s32 32, 32
      %12 = vsyncadd [#allocation3], %s11
      %s14 = sshll.u32 [#allocation2], 4
      %s15 = int_to_ptr.vmem [resolvable:$true] %s14
      %17 = dma.hbm_to_vmem [thread:$0]  %s0, 32, %s15, [#allocation3]
    $region5: #{tpu_custom_call.1} parent=1 // pred_fallthru
      _
    // Predicated region
    $region6: #{tpu_custom_call.1} parent=1 // pred_check
      _
    $region7: #{tpu_custom_call.1} parent=1 // pred_check_branch
      %19 = sbr.rel (0) target = $region9
    $region8: #{tpu_custom_call.1} parent=1 // pred_region
      %20 = dma.done [#allocation3], 32
    $region9: #{tpu_custom_call.1} parent=1 // pred_fallthru
      _
    %vm21 = vcmask 123904
    %22 = vst.msk [vmem:[#allocation5] sm:$0x3] %vm21, 0.0
    %v23 = vld [vmem:[#allocation2] sm:$0x3]
    %vm24 = vcmask 25600
    %25 = vst.msk [vmem:[#allocation5] sm:$0x3] %vm24, %v23
    // Predicated region
    $region10: #{tpu_custom_call.1} parent=1 // pred_check
      _
    $region11: #{tpu_custom_call.1} parent=1 // pred_check_branch
      %27 = sbr.rel (0) target = $region13
    $region12: #{tpu_custom_call.1} parent=1 // pred_region
      %s29 = ssub.s32 32, 32
      %30 = vsyncadd [#allocation4], %s29
      %s32 = sshll.u32 [#allocation5], 4
      %s33 = int_to_ptr.vmem [resolvable:$true] %s32
      %35 = dma.vmem_to_hbm [thread:$0]  %s33, 32, %s1, [#allocation4]
    $region13: #{tpu_custom_call.1} parent=1 // pred_fallthru
      _
    // Predicated region
    $region14: #{tpu_custom_call.1} parent=1 // pred_check
      _
    $region15: #{tpu_custom_call.1} parent=1 // pred_check_branch
      %37 = sbr.rel (0) target = $region17
    $region16: #{tpu_custom_call.1} parent=1 // pred_region
      %38 = dma.done [#allocation4], 32
    $region17: #{tpu_custom_call.1} parent=1 // pred_fallthru
      _
    %39 = vsyncpa [#allocation3], 1
    %40 = vsyncpa [#allocation4], 1

</llo_original>
